<compile_context>
chip_gen: v5e
topology: v5e:2x2
jax: 0.10.0
libtpu: 0.0.40
codegen_flags: <defaults>
</compile_context>

<pallas_src>
import functools

import jax
import jax.numpy as jnp
from jax import lax
from jax.experimental import pallas as pl
from jax.experimental.pallas import tpu as pltpu

_BN_EPS = 1e-5


# ---------------------------------------------------------------------------
# Pallas kernels
# ---------------------------------------------------------------------------

def _round_up(x, m):
    return (x + m - 1) // m * m


def _gemm_affine_act_kernel(act):
    """o = act((x @ w) * scale + bias); scale/bias broadcast per column."""

    def kernel(x_ref, w_ref, s_ref, b_ref, o_ref):
        acc = jnp.dot(x_ref[...], w_ref[...],
                      preferred_element_type=jnp.float32)
        y = acc * s_ref[...] + b_ref[...]
        if act == "relu":
            y = jnp.maximum(y, 0.0)
        elif act == "sigmoid":
            y = jax.nn.sigmoid(y)
        o_ref[...] = y.astype(o_ref.dtype)

    return kernel


def gemm_affine_act(x, w, scale, bias, act="none", tile_m=256):
    """Fused GEMM + per-column affine + activation on the MXU.

    x: (M, K), w: (K, N), scale/bias: (N,)  ->  (M, N) float32.
    Used for all convs (im2col / 1x1), transposed convs and SE FC layers.
    """
    M, K = x.shape
    N = w.shape[1]
    x = x.astype(jnp.float32)
    w = w.astype(jnp.float32)

    tm = tile_m if M > tile_m else _round_up(M, 8)
    mp = _round_up(M, tm)
    if mp != M:                       # only tiny inputs (e.g. SE squeeze, M=B)
        x = jnp.pad(x, ((0, mp - M), (0, 0)))
    grid_m = mp // tm

    s2 = scale.reshape(1, N).astype(jnp.float32)
    b2 = bias.reshape(1, N).astype(jnp.float32)

    out = pl.pallas_call(
        _gemm_affine_act_kernel(act),
        out_shape=jax.ShapeDtypeStruct((mp, N), jnp.float32),
        grid_spec=pltpu.PrefetchScalarGridSpec(
            num_scalar_prefetch=0,
            grid=(grid_m,),
            in_specs=[
                pl.BlockSpec((tm, K), lambda i: (i, 0)),
                pl.BlockSpec((K, N), lambda i: (0, 0)),
                pl.BlockSpec((1, N), lambda i: (0, 0)),
                pl.BlockSpec((1, N), lambda i: (0, 0)),
            ],
            out_specs=pl.BlockSpec((tm, N), lambda i: (i, 0)),
        ),
        compiler_params=pltpu.CompilerParams(
            dimension_semantics=("parallel",)),
    )(x, w, s2, b2)
    return out[:M]


def _add_relu_kernel(a_ref, b_ref, o_ref):
    o_ref[...] = jnp.maximum(a_ref[...] + b_ref[...], 0.0)


def add_relu(a, b):
    """relu(a + b) on NHWC tensors (AttentionBlock psi pre-activation)."""
    B, H, W, C = a.shape
    out = pl.pallas_call(
        _add_relu_kernel,
        out_shape=jax.ShapeDtypeStruct((B * H * W, C), jnp.float32),
    )(a.reshape(B * H * W, C).astype(jnp.float32),
      b.reshape(B * H * W, C).astype(jnp.float32))
    return out.reshape(B, H, W, C)


def _pixel_gate_kernel(x_ref, p_ref, o_ref):
    o_ref[...] = x_ref[...] * p_ref[...]


def pixel_gate(x, psi):
    """x * psi, psi broadcast over channels (AttentionBlock output)."""
    B, H, W, C = x.shape
    out = pl.pallas_call(
        _pixel_gate_kernel,
        out_shape=jax.ShapeDtypeStruct((B * H * W, C), jnp.float32),
    )(x.reshape(B * H * W, C).astype(jnp.float32),
      psi.reshape(B * H * W, 1).astype(jnp.float32))
    return out.reshape(B, H, W, C)


def _channel_gate_kernel(x_ref, g_ref, o_ref):
    o_ref[...] = x_ref[...] * g_ref[...]


def _channel_gate_add_relu_kernel(x_ref, g_ref, r_ref, o_ref):
    o_ref[...] = jnp.maximum(x_ref[...] * g_ref[...] + r_ref[...], 0.0)


def channel_gate(x, gate):
    """SEBlock excitation: x * gate[b, c], broadcast over H, W."""
    B, H, W, C = x.shape
    out = pl.pallas_call(
        _channel_gate_kernel,
        out_shape=jax.ShapeDtypeStruct((B, H * W, C), jnp.float32),
        grid_spec=pltpu.PrefetchScalarGridSpec(
            num_scalar_prefetch=0,
            grid=(B,),
            in_specs=[
                pl.BlockSpec((1, H * W, C), lambda b: (b, 0, 0)),
                pl.BlockSpec((1, 1, C), lambda b: (b, 0, 0)),
            ],
            out_specs=pl.BlockSpec((1, H * W, C), lambda b: (b, 0, 0)),
        ),
        compiler_params=pltpu.CompilerParams(
            dimension_semantics=("parallel",)),
    )(x.reshape(B, H * W, C).astype(jnp.float32),
      gate.reshape(B, 1, C).astype(jnp.float32))
    return out.reshape(B, H, W, C)


def channel_gate_add_relu(x, gate, res):
    """ResidualBlock tail: relu(SE(x) + shortcut), fused in one pass."""
    B, H, W, C = x.shape
    out = pl.pallas_call(
        _channel_gate_add_relu_kernel,
        out_shape=jax.ShapeDtypeStruct((B, H * W, C), jnp.float32),
        grid_spec=pltpu.PrefetchScalarGridSpec(
            num_scalar_prefetch=0,
            grid=(B,),
            in_specs=[
                pl.BlockSpec((1, H * W, C), lambda b: (b, 0, 0)),
                pl.BlockSpec((1, 1, C), lambda b: (b, 0, 0)),
                pl.BlockSpec((1, H * W, C), lambda b: (b, 0, 0)),
            ],
            out_specs=pl.BlockSpec((1, H * W, C), lambda b: (b, 0, 0)),
        ),
        compiler_params=pltpu.CompilerParams(
            dimension_semantics=("parallel",)),
    )(x.reshape(B, H * W, C).astype(jnp.float32),
      gate.reshape(B, 1, C).astype(jnp.float32),
      res.reshape(B, H * W, C).astype(jnp.float32))
    return out.reshape(B, H, W, C)


# ---------------------------------------------------------------------------
# Layer ops built on the kernels (with a pure-jnp reference path for checking)
# ---------------------------------------------------------------------------

def _matmul_affine(x, w, scale, bias, act, use_pallas):
    if use_pallas:
        return gemm_affine_act(x, w, scale, bias, act)
    y = jnp.dot(x.astype(jnp.float32), w.astype(jnp.float32),
                precision=lax.Precision.HIGHEST) * scale + bias
    if act == "relu":
        y = jnp.maximum(y, 0.0)
    elif act == "sigmoid":
        y = jax.nn.sigmoid(y)
    return y


def _fold_bn(conv_bias, bn, n):
    # TODO(synk): BatchNorm is folded in inference form (running stats);
    # training-mode batch statistics are not implemented.
    if bn is None:
        return jnp.ones((n,), jnp.float32), conv_bias.astype(jnp.float32)
    scale = bn["gamma"] * lax.rsqrt(bn["var"] + _BN_EPS)
    bias = bn["beta"] + (conv_bias - bn["mean"]) * scale
    return scale, bias


def _im2col_3x3(x):
    """(B,H,W,C) -> (B*H*W, 9*C); taps ordered (dy, dx) row-major.  Pure
    layout (pad + shifted slices) in JAX feeding the GEMM kernel."""
    B, H, W, C = x.shape
    xp = jnp.pad(x, ((0, 0), (1, 1), (1, 1), (0, 0)))
    taps = [xp[:, dy:dy + H, dx:dx + W, :]
            for dy in range(3) for dx in range(3)]
    return jnp.concatenate(taps, axis=-1).reshape(B * H * W, 9 * C)


def conv2d(x, p, bn=None, act="none", ksize=1, use_pallas=True):
    """Conv2d (k=1 or k=3, padding='same') + folded BN + activation."""
    B, H, W, C = x.shape
    n = p["w"].shape[1]
    cols = _im2col_3x3(x) if ksize == 3 else x.reshape(B * H * W, C)
    scale, bias = _fold_bn(p["b"], bn, n)
    y = _matmul_affine(cols, p["w"], scale, bias, act, use_pallas)
    return y.reshape(B, H, W, n)


def conv_transpose_2x2(x, p, use_pallas=True):
    """ConvTranspose2d(kernel=2, stride=2): one GEMM to (.., 4*Cout) followed
    by a pure-layout pixel interleave doubling the spatial resolution."""
    B, H, W, C = x.shape
    cout = p["b"].shape[0]
    scale = jnp.ones((4 * cout,), jnp.float32)
    bias = jnp.tile(p["b"].astype(jnp.float32), 4)
    y = _matmul_affine(x.reshape(B * H * W, C), p["w"], scale, bias, "none",
                       use_pallas)
    y = y.reshape(B, H, W, 2, 2, cout).transpose(0, 1, 3, 2, 4, 5)
    return y.reshape(B, 2 * H, 2 * W, cout)


def max_pool_2x2(x):
    # MaxPool2d(2, 2): pure layout reshape + tiny window reduce (JAX).
    B, H, W, C = x.shape
    return jnp.max(x.reshape(B, H // 2, 2, W // 2, 2, C), axis=(2, 4))


def se_block(x, p, use_pallas=True, res=None):
    """SEBlock: global-average squeeze -> FC/ReLU -> FC/sigmoid -> channel
    gate.  When `res` is given, the ResidualBlock `+shortcut, relu` tail is
    fused into the gating kernel."""
    B, H, W, C = x.shape
    pooled = jnp.mean(x, axis=(1, 2))  # squeeze: tiny reduce, left to XLA
    hid = p["w1"].shape[1]
    h = _matmul_affine(pooled, p["w1"], jnp.ones((hid,), jnp.float32),
                       jnp.zeros((hid,), jnp.float32), "relu", use_pallas)
    gate = _matmul_affine(h, p["w2"], jnp.ones((C,), jnp.float32),
                          jnp.zeros((C,), jnp.float32), "sigmoid", use_pallas)
    if use_pallas:
        if res is not None:
            return channel_gate_add_relu(x, gate, res)
        return channel_gate(x, gate)
    y = x * gate[:, None, None, :]
    if res is not None:
        y = jnp.maximum(y + res, 0.0)
    return y


def residual_block(x, p, use_pallas=True):
    out = conv2d(x, p["conv1"], p["bn1"], act="relu", ksize=3,
                 use_pallas=use_pallas)
    out = conv2d(out, p["conv2"], p["bn2"], act="none", ksize=3,
                 use_pallas=use_pallas)
    if p["shortcut_conv"] is not None:
        res = conv2d(x, p["shortcut_conv"], p["shortcut_bn"], act="none",
                     ksize=1, use_pallas=use_pallas)
    else:
        res = x.astype(jnp.float32)
    return se_block(out, p["se"], use_pallas=use_pallas, res=res)


def dense_block(x, p, use_pallas=True):
    feats = [x]
    for layer in p["layers"]:
        inp = feats[0] if len(feats) == 1 else jnp.concatenate(feats, axis=-1)
        feats.append(residual_block(inp, layer, use_pallas=use_pallas))
    return jnp.concatenate(feats, axis=-1)


def attention_block(g, x, p, use_pallas=True):
    g1 = conv2d(g, p["wg_conv"], p["wg_bn"], act="none", ksize=1,
                use_pallas=use_pallas)
    x1 = conv2d(x, p["wx_conv"], p["wx_bn"], act="none", ksize=1,
                use_pallas=use_pallas)
    psi = add_relu(g1, x1) if use_pallas else jnp.maximum(g1 + x1, 0.0)
    psi = se_block(psi, p["se"], use_pallas=use_pallas)
    psi = conv2d(psi, p["psi_conv"], p["psi_bn"], act="sigmoid", ksize=1,
                 use_pallas=use_pallas)                       # (B, H, W, 1)
    return pixel_gate(x, psi) if use_pallas else x * psi


def unetpp_forward(params, x_nchw, deep_supervision=True, use_pallas=True):
    """Forward pass of the enhanced U-Net++ (NCHW in / NCHW out)."""
    x = jnp.transpose(x_nchw, (0, 2, 3, 1)).astype(jnp.float32)  # NHWC

    x = conv2d(x, params["initial_conv"], params["initial_bn"], act="relu",
               ksize=3, use_pallas=use_pallas)

    skips = []
    for stage in params["downs"]:
        x = dense_block(x, stage["dense"], use_pallas=use_pallas)
        x = conv2d(x, stage["proj"], None, act="none", ksize=1,
                   use_pallas=use_pallas)
        skips.append(x)
        x = max_pool_2x2(x)

    x = dense_block(x, params["bottleneck"], use_pallas=use_pallas)

    skips = skips[::-1]
    deep_outputs = []
    for i, stage in enumerate(params["ups"]):
        x = conv_transpose_2x2(x, stage["up"], use_pallas=use_pallas)
        skip = skips[i]
        # TODO(synk): the PyTorch forward calls F.resize on a spatial mismatch
        # (undefined in torch.nn.functional); with stride-2 pool/up-conv on
        # even spatial sizes shapes always match, so that branch is skipped.
        if stage["att"] is not None:
            skip = attention_block(x, skip, stage["att"],
                                   use_pallas=use_pallas)
        x = jnp.concatenate([skip, x], axis=-1)
        x = dense_block(x, stage["dense"], use_pallas=use_pallas)
        if deep_supervision:
            y = conv2d(x, params["ds_convs"][i], None, act="none", ksize=1,
                       use_pallas=use_pallas)
            deep_outputs.append(jnp.transpose(y, (0, 3, 1, 2)))

    final = conv2d(x, params["final_conv"], None, act="none", ksize=1,
                   use_pallas=use_pallas)
    final = jnp.transpose(final, (0, 3, 1, 2))
    if deep_supervision:
        return final, deep_outputs
    return final


# ---------------------------------------------------------------------------
# Parameter construction (shapes derived from the forward-pass data flow)
# ---------------------------------------------------------------------------

def _init_conv(key, cin, cout, ksize):
    kw, kb = jax.random.split(key)
    fan_in = cin * ksize * ksize
    w = jax.random.normal(kw, (fan_in, cout), jnp.float32) / jnp.sqrt(fan_in)
    b = 0.02 * jax.random.normal(kb, (cout,), jnp.float32)
    return {"w": w, "b": b}


def _init_bn(key, c):
    kg, kb, km = jax.random.split(key, 3)
    return {
        "gamma": 1.0 + 0.1 * jax.random.normal(kg, (c,), jnp.float32),
        "beta": 0.1 * jax.random.normal(kb, (c,), jnp.float32),
        "mean": 0.1 * jax.random.normal(km, (c,), jnp.float32),
        "var": jnp.ones((c,), jnp.float32),
    }


def _init_se(key, c, reduction):
    # TODO(synk): PyTorch's SEBlock default reduction=16 gives a 0-width hidden
    # layer for small channel counts; reduction is exposed and clamped to >= 1.
    hid = max(c // reduction, 1)
    k1, k2 = jax.random.split(key)
    return {
        "w1": jax.random.normal(k1, (c, hid), jnp.float32) / jnp.sqrt(c),
        "w2": jax.random.normal(k2, (hid, c), jnp.float32) / jnp.sqrt(hid),
    }


def _init_residual(key, cin, cout, reduction):
    ks = jax.random.split(key, 7)
    p = {
        "conv1": _init_conv(ks[0], cin, cout, 3),
        "bn1": _init_bn(ks[1], cout),
        "conv2": _init_conv(ks[2], cout, cout, 3),
        "bn2": _init_bn(ks[3], cout),
        "se": _init_se(ks[4], cout, reduction),
        "shortcut_conv": None,
        "shortcut_bn": None,
    }
    if cin != cout:
        p["shortcut_conv"] = _init_conv(ks[5], cin, cout, 1)
        p["shortcut_bn"] = _init_bn(ks[6], cout)
    return p


def _init_dense(key, cin, growth, num_layers, reduction):
    ks = jax.random.split(key, num_layers)
    layers, c = [], cin
    for i in range(num_layers):
        layers.append(_init_residual(ks[i], c, growth, reduction))
        c += growth
    return {"layers": layers}


def _init_attention(key, f_g, f_l, f_int, reduction):
    ks = jax.random.split(key, 7)
    return {
        "wg_conv": _init_conv(ks[0], f_g, f_int, 1),
        "wg_bn": _init_bn(ks[1], f_int),
        "wx_conv": _init_conv(ks[2], f_l, f_int, 1),
        "wx_bn": _init_bn(ks[3], f_int),
        "psi_conv": _init_conv(ks[4], f_int, 1, 1),
        "psi_bn": _init_bn(ks[5], 1),
        "se": _init_se(ks[6], f_int, reduction),
    }


def _init_conv_transpose(key, cin, cout):
    kw, kb = jax.random.split(key)
    # Columns ordered (dy*2 + dx)*cout + c, matching the output interleave.
    w = jax.random.normal(kw, (cin, 4 * cout), jnp.float32) / jnp.sqrt(cin)
    b = 0.02 * jax.random.normal(kb, (cout,), jnp.float32)
    return {"w": w, "b": b}


def init_unetpp(key, in_channels=1, out_channels=1, features=(8, 16, 32),
                growth_rate=4, num_layers=2, reduction=2):
    keys = iter(jax.random.split(key, 64))
    nk = lambda: next(keys)
    g_total = growth_rate * num_layers

    params = {
        "initial_conv": _init_conv(nk(), in_channels, features[0], 3),
        "initial_bn": _init_bn(nk(), features[0]),
    }

    ch = features[0]
    downs, skip_chs = [], []
    for i in range(len(features) - 1):
        dense = _init_dense(nk(), ch, growth_rate, num_layers, reduction)
        ch += g_total
        proj = _init_conv(nk(), ch, features[i + 1], 1)
        downs.append({"dense": dense, "proj": proj})
        ch = features[i + 1]
        skip_chs.append(ch)
    params["downs"] = downs

    params["bottleneck"] = _init_dense(nk(), ch, growth_rate, num_layers,
                                       reduction)
    ch += g_total

    ups, ds_convs = [], []
    skip_rev = skip_chs[::-1]
    for i, feat in enumerate(reversed(features[:-1])):
        up = _init_conv_transpose(nk(), ch, feat)
        skip_ch = skip_rev[i]
        att = None
        if i < len(features) - 2:
            att = _init_attention(nk(), feat, skip_ch, max(feat // 2, 1),
                                  reduction)
        dense = _init_dense(nk(), skip_ch + feat, growth_rate, num_layers,
                            reduction)
        ch = skip_ch + feat + g_total
        ups.append({"up": up, "att": att, "dense": dense})
        ds_convs.append(_init_conv(nk(), ch, out_channels, 1))
    params["ups"] = ups
    params["ds_convs"] = ds_convs
    params["final_conv"] = _init_conv(nk(), ch, out_channels, 1)
    return params


# ---------------------------------------------------------------------------
# Main
# ---------------------------------------------------------------------------

if __name__ == "__main__":
    key = jax.random.PRNGKey(0)
    k_param, k_input, k_check = jax.random.split(key, 3)

    B, C_IN, H, W = 2, 1, 16, 16
    FEATURES = (8, 16, 32)
    x = jax.random.normal(k_input, (B, C_IN, H, W), jnp.float32)
    params = init_unetpp(k_param, in_channels=C_IN, out_channels=1,
                         features=FEATURES, growth_rate=4, num_layers=2,
                         reduction=2)

    # Sanity check: im2col conv-as-GEMM Pallas kernel vs. lax.conv.
    cin, cout = 8, 4
    xc = jax.random.normal(k_check, (B, H, W, cin), jnp.float32)
    conv_p = _init_conv(jax.random.fold_in(k_check, 1), cin, cout, 3)
    conv_ref = lax.conv_general_dilated(
        xc, conv_p["w"].reshape(3, 3, cin, cout), (1, 1), "SAME",
        dimension_numbers=("NHWC", "HWIO", "NHWC"),
        precision=lax.Precision.HIGHEST) + conv_p["b"]
    conv_got = conv2d(xc, conv_p, None, act="none", ksize=3, use_pallas=True)
    assert jnp.allclose(conv_got, conv_ref, rtol=2e-2, atol=2e-2), "conv3x3"

    # Full forward: Pallas kernel path vs. pure-jnp reference path.
    fwd_pallas = jax.jit(functools.partial(
        unetpp_forward, deep_supervision=True, use_pallas=True))
    fwd_ref = jax.jit(functools.partial(
        unetpp_forward, deep_supervision=True, use_pallas=False))

    main_out, deep_outs = fwd_pallas(params, x)
    main_out = jax.block_until_ready(main_out)
    deep_outs = [jax.block_until_ready(d) for d in deep_outs]
    ref_main, ref_deep = fwd_ref(params, x)

    assert main_out.shape == (B, 1, H, W)
    assert len(deep_outs) == len(FEATURES) - 1
    assert deep_outs[0].shape == (B, 1, H // 2, W // 2)
    assert deep_outs[-1].shape == (B, 1, H, W)
    assert bool(jnp.all(jnp.isfinite(main_out)))
    assert jnp.allclose(main_out, ref_main, rtol=2e-2, atol=2e-2), "main out"
    for d, r in zip(deep_outs, ref_deep):
        assert jnp.allclose(d, r, rtol=2e-2, atol=2e-2), "deep supervision"

    print("KERNEL_OK")
</pallas_src>

<mosaic_0001>
module attributes {stable_mosaic.version = 11 : i64} {
  func.func @kernel(%arg0: i32, %arg1: memref<256x72xf32, #tpu.memory_space<vmem>>, %arg2: memref<72x4xf32, #tpu.memory_space<vmem>>, %arg3: memref<1x4xf32, #tpu.memory_space<vmem>>, %arg4: memref<1x4xf32, #tpu.memory_space<vmem>>, %arg5: memref<256x4xf32, #tpu.memory_space<vmem>>) attributes {dimension_semantics = [#tpu.dimension_semantics<parallel>], iteration_bounds = array<i64: 2>, scalar_prefetch = 0 : i64, scratch_operands = 0 : i64, tpu.core_type = #tpu.core_type<tc>, window_params = [{transform_indices = @transform_0, window_bounds = array<i64: 256, 72>}, {pipeline_mode = #tpu.pipeline_mode<synchronous>, transform_indices = @transform_1, window_bounds = array<i64: 72, 4>}, {pipeline_mode = #tpu.pipeline_mode<synchronous>, transform_indices = @transform_2, window_bounds = array<i64: 1, 4>}, {pipeline_mode = #tpu.pipeline_mode<synchronous>, transform_indices = @transform_3, window_bounds = array<i64: 1, 4>}, {transform_indices = @transform_4, window_bounds = array<i64: 256, 4>}]} {
    %c0 = arith.constant 0 : index
    %c0_0 = arith.constant 0 : index
    %0 = vector.load %arg1[%c0, %c0_0] : memref<256x72xf32, #tpu.memory_space<vmem>>, vector<256x72xf32>
    %c0_1 = arith.constant 0 : index
    %c0_2 = arith.constant 0 : index
    %1 = vector.load %arg2[%c0_1, %c0_2] : memref<72x4xf32, #tpu.memory_space<vmem>>, vector<72x4xf32>
    %cst = arith.constant dense<0.000000e+00> : vector<256x4xf32>
    %2 = tpu.matmul %0, %1, %cst {dimension_numbers = #tpu.dot_dimension_numbers<[1], [0], [0], [1], [0, 0, 1, 1], [], []>} : vector<256x72xf32>, vector<72x4xf32>, vector<256x4xf32> -> vector<256x4xf32>
    %c0_3 = arith.constant 0 : index
    %c0_4 = arith.constant 0 : index
    %3 = vector.load %arg3[%c0_3, %c0_4] : memref<1x4xf32, #tpu.memory_space<vmem>>, vector<1x4xf32>
    %4 = vector.broadcast %3 : vector<1x4xf32> to vector<256x4xf32>
    %5 = arith.mulf %2, %4 : vector<256x4xf32>
    %c0_5 = arith.constant 0 : index
    %c0_6 = arith.constant 0 : index
    %6 = vector.load %arg4[%c0_5, %c0_6] : memref<1x4xf32, #tpu.memory_space<vmem>>, vector<1x4xf32>
    %7 = vector.broadcast %6 : vector<1x4xf32> to vector<256x4xf32>
    %8 = arith.addf %5, %7 : vector<256x4xf32>
    %c0_7 = arith.constant 0 : index
    %c0_8 = arith.constant 0 : index
    %9 = vector.load %arg5[%c0_7, %c0_8] : memref<256x4xf32, #tpu.memory_space<vmem>>, vector<256x4xf32>
    tpu.vector_store %arg5[%c0_7, %c0_8], %8 {strides = array<i32>} : memref<256x4xf32, #tpu.memory_space<vmem>>, vector<256x4xf32>,
    return
  }
  func.func @transform_0(%arg0: i32) -> (i32, i32) {
    %c0_i32 = arith.constant 0 : i32
    %c0_i32_0 = arith.constant 0 : i32
    return %arg0, %c0_i32 : i32, i32
  }
  func.func @transform_1(%arg0: i32) -> (i32, i32) {
    %c0_i32 = arith.constant 0 : i32
    %c0_i32_0 = arith.constant 0 : i32
    %c0_i32_1 = arith.constant 0 : i32
    return %c0_i32, %c0_i32_0 : i32, i32
  }
  func.func @transform_2(%arg0: i32) -> (i32, i32) {
    %c0_i32 = arith.constant 0 : i32
    %c0_i32_0 = arith.constant 0 : i32
    %c0_i32_1 = arith.constant 0 : i32
    return %c0_i32, %c0_i32_0 : i32, i32
  }
  func.func @transform_3(%arg0: i32) -> (i32, i32) {
    %c0_i32 = arith.constant 0 : i32
    %c0_i32_0 = arith.constant 0 : i32
    %c0_i32_1 = arith.constant 0 : i32
    return %c0_i32, %c0_i32_0 : i32, i32
  }
  func.func @transform_4(%arg0: i32) -> (i32, i32) {
    %c0_i32 = arith.constant 0 : i32
    %c0_i32_0 = arith.constant 0 : i32
    return %arg0, %c0_i32 : i32, i32
  }
}

</mosaic_0001>

<llo_original>
// kernel: tpu_custom_call.1
$region0: #{tpu_custom_call.1}
  #allocation0 [shape = 'u32[]', space=smem, size = 0x4, offset = 0x4, fixed_abs, tag = 'smem constant byte address 0x4 - core index']
  #allocation1 [shape = 'u32[72,128]{1,0:T(1,128)}', space=vmem, size = 0x9000, scoped, tag = 'internal scratch']
  %s0 = inlined_call_operand.vmem [shape: f32[512,72], index: 0, kind: input, shape index: {}]
  %s1 = inlined_call_operand.vmem [shape: f32[72,4], index: 1, kind: input, shape index: {}]
  %s2 = inlined_call_operand.vmem [shape: f32[1,4], index: 2, kind: input, shape index: {}]
  %s3 = inlined_call_operand.vmem [shape: f32[1,4], index: 3, kind: input, shape index: {}]
  %s4 = inlined_call_operand.vmem [shape: f32[512,4], index: 4, kind: output, shape index: {}]
  %s5 = sld [smem:[#allocation0]]
  $region49: #{tpu_custom_call.1} parent=0
    _
  %s7 = ssub.s32 1, %s5
  %s8 = scalar_select 0, %s7, %s5
  loop: start=0, step=1, limit=4
  $region2: #{tpu_custom_call.1} parent=0 // loop_pre_header
    _
  $region3: #{tpu_custom_call.1} parent=0 // loop_header
    %s10 = sphi 0, %s14
    %p11 = scmp.ge.s32.totalorder %s10, 4
    %s20 = sphi 0, %s22
    %s23 = sphi 0, %s20
    %s24 = sphi 0, %s23
    %s40 = sphi 0, %s24
    %s44 = sphi 0, %s44
    %s46 = sphi 0, %s44
    %s47 = sphi 0, %s46
    %s61 = sphi 0, %s47
    %s65 = sphi 0, %s65
    %s67 = sphi 0, %s65
    %s68 = sphi 0, %s67
    %s82 = sphi 0, %s68
    %s86 = sphi 0, %s86
    %s88 = sphi 0, %s86
    %s89 = sphi 0, %s88
    %s103 = sphi 0, %s89
    %s109 = sphi 0, %s111
    %s112 = sphi 0, %s109
    %s113 = sphi 0, %s112
    %s129 = sphi 0, %s113
  $region4: #{tpu_custom_call.1} parent=0 // loop_header_branch
    %13 = sbr.rel (%p11) target = $region8
  $region5: #{tpu_custom_call.1} parent=0 // loop_body
    %s15 = ssub.s32 %s10, 1
    %s16 = ssub.s32 %s10, 2
    %s17 = sadd.s32 %s10, 1
    %s18 = ssub.s32 %s10, %s17
    %p19 = scmp.eq.s32.totalorder %s18, 0
    %s21 = sadd.s32 %s20, 1
    %s22 = scalar_select %p19, %s20, %s21
    %p25 = pneg %p19
    %p26 = scmp.eq.s32.totalorder %s10, 1
    %p27 = por %p25, %p26
    %p28 = scmp.ne.s32.totalorder %s20, %s23
    %p29 = scmp.eq.s32.totalorder %s10, 0
    %p30 = por %p28, %p29
    %p31 = scmp.ne.s32.totalorder %s20, %s23
    %p32 = scmp.eq.s32.totalorder %s15, 1
    %p33 = por %p31, %p32
    %p34 = scmp.ne.s32.totalorder %s23, %s24
    %p35 = scmp.eq.s32.totalorder %s15, 0
    %p36 = por %p34, %p35
    %p37 = scmp.ne.s32.totalorder %s23, %s24
    %p38 = scmp.eq.s32.totalorder %s16, 1
    %p39 = por %p37, %p38
    %p41 = scmp.ne.s32.totalorder %s24, %s40
    %p42 = scmp.eq.s32.totalorder %s16, 0
    %p43 = por %p41, %p42
    %s45 = sadd.s32 %s44, 1
    %p48 = scmp.eq.s32.totalorder %s10, 1
    %p49 = scmp.ne.s32.totalorder %s44, %s46
    %p50 = scmp.eq.s32.totalorder %s10, 0
    %p51 = por %p49, %p50
    %p52 = scmp.ne.s32.totalorder %s44, %s46
    %p53 = scmp.eq.s32.totalorder %s15, 1
    %p54 = por %p52, %p53
    %p55 = scmp.ne.s32.totalorder %s46, %s47
    %p56 = scmp.eq.s32.totalorder %s15, 0
    %p57 = por %p55, %p56
    %p58 = scmp.ne.s32.totalorder %s46, %s47
    %p59 = scmp.eq.s32.totalorder %s16, 1
    %p60 = por %p58, %p59
    %p62 = scmp.ne.s32.totalorder %s47, %s61
    %p63 = scmp.eq.s32.totalorder %s16, 0
    %p64 = por %p62, %p63
    %s66 = sadd.s32 %s65, 1
    %p69 = scmp.eq.s32.totalorder %s10, 1
    %p70 = scmp.ne.s32.totalorder %s65, %s67
    %p71 = scmp.eq.s32.totalorder %s10, 0
    %p72 = por %p70, %p71
    %p73 = scmp.ne.s32.totalorder %s65, %s67
    %p74 = scmp.eq.s32.totalorder %s15, 1
    %p75 = por %p73, %p74
    %p76 = scmp.ne.s32.totalorder %s67, %s68
    %p77 = scmp.eq.s32.totalorder %s15, 0
    %p78 = por %p76, %p77
    %p79 = scmp.ne.s32.totalorder %s67, %s68
    %p80 = scmp.eq.s32.totalorder %s16, 1
    %p81 = por %p79, %p80
    %p83 = scmp.ne.s32.totalorder %s68, %s82
    %p84 = scmp.eq.s32.totalorder %s16, 0
    %p85 = por %p83, %p84
    %s87 = sadd.s32 %s86, 1
    %p90 = scmp.eq.s32.totalorder %s10, 1
    %p91 = scmp.ne.s32.totalorder %s86, %s88
    %p92 = scmp.eq.s32.totalorder %s10, 0
    %p93 = por %p91, %p92
    %p94 = scmp.ne.s32.totalorder %s86, %s88
    %p95 = scmp.eq.s32.totalorder %s15, 1
    %p96 = por %p94, %p95
    %p97 = scmp.ne.s32.totalorder %s88, %s89
    %p98 = scmp.eq.s32.totalorder %s15, 0
    %p99 = por %p97, %p98
    %p100 = scmp.ne.s32.totalorder %s88, %s89
    %p101 = scmp.eq.s32.totalorder %s16, 1
    %p102 = por %p100, %p101
    %p104 = scmp.ne.s32.totalorder %s89, %s103
    %p105 = scmp.eq.s32.totalorder %s16, 0
    %p106 = por %p104, %p105
    %s107 = ssub.s32 %s10, %s17
    %p108 = scmp.eq.s32.totalorder %s107, 0
    %s110 = sadd.s32 %s109, 1
    %s111 = scalar_select %p108, %s109, %s110
    %p114 = pneg %p108
    %p115 = scmp.eq.s32.totalorder %s10, 1
    %p116 = por %p114, %p115
    %p117 = scmp.ne.s32.totalorder %s109, %s112
    %p118 = scmp.eq.s32.totalorder %s10, 0
    %p119 = por %p117, %p118
    %p120 = scmp.ne.s32.totalorder %s109, %s112
    %p121 = scmp.eq.s32.totalorder %s15, 1
    %p122 = por %p120, %p121
    %p123 = scmp.ne.s32.totalorder %s112, %s113
    %p124 = scmp.eq.s32.totalorder %s15, 0
    %p125 = por %p123, %p124
    %p126 = scmp.ne.s32.totalorder %s112, %s113
    %p127 = scmp.eq.s32.totalorder %s16, 1
    %p128 = por %p126, %p127
    %p130 = scmp.ne.s32.totalorder %s113, %s129
    %p131 = scmp.eq.s32.totalorder %s16, 0
    %p132 = por %p130, %p131
    %p133 = scmp.le.s32.totalorder 1, %s10
    %p134 = scmp.lt.s32.totalorder %s10, 3
    %p135 = pnand %p133, %p134
    %p136 = pneg %p135
    // Predicated region
    $region9: #{tpu_custom_call.1} parent=5 // pred_check
      _
    $region10: #{tpu_custom_call.1} parent=5 // pred_check_branch
      %138 = sbr.rel (%p135) target = $region12
    $region11: #{tpu_custom_call.1} parent=5 // pred_region
      %s139 = ssub.s32 %s10, 1
      // Predicated region
      $region13: #{tpu_custom_call.1} parent=11 // pred_check
        %p140 = pneg %p57
      $region14: #{tpu_custom_call.1} parent=11 // pred_check_branch
        %142 = sbr.rel (%p140) target = $region16
      $region15: #{tpu_custom_call.1} parent=11 // pred_region
        _
      $region16: #{tpu_custom_call.1} parent=11 // pred_fallthru
        _
      // Predicated region
      $region17: #{tpu_custom_call.1} parent=11 // pred_check
        %p143 = pneg %p78
      $region18: #{tpu_custom_call.1} parent=11 // pred_check_branch
        %145 = sbr.rel (%p143) target = $region20
      $region19: #{tpu_custom_call.1} parent=11 // pred_region
        _
      $region20: #{tpu_custom_call.1} parent=11 // pred_fallthru
        _
      // Predicated region
      $region21: #{tpu_custom_call.1} parent=11 // pred_check
        %p146 = pneg %p99
      $region22: #{tpu_custom_call.1} parent=11 // pred_check_branch
        %148 = sbr.rel (%p146) target = $region24
      $region23: #{tpu_custom_call.1} parent=11 // pred_region
        _
      $region24: #{tpu_custom_call.1} parent=11 // pred_fallthru
        _
    $region12: #{tpu_custom_call.1} parent=5 // pred_fallthru
      _
    %p149 = scmp.lt.s32.totalorder %s10, 2
    // Predicated region
    $region25: #{tpu_custom_call.1} parent=5 // pred_check
      %p150 = pneg %p149
    $region26: #{tpu_custom_call.1} parent=5 // pred_check_branch
      %152 = sbr.rel (%p150) target = $region28
    $region27: #{tpu_custom_call.1} parent=5 // pred_region
      // Predicated region
      $region29: #{tpu_custom_call.1} parent=27 // pred_check
        %p153 = pneg %p30
      $region30: #{tpu_custom_call.1} parent=27 // pred_check_branch
        %155 = sbr.rel (%p153) target = $region32
      $region31: #{tpu_custom_call.1} parent=27 // pred_region
        %s156 = smul.u32 32, %s10
        %p157 = scmp.lt.s32.totalorder %s156, 63
        %s158 = scalar_select %p157, %s156, 63
        %s159 = smul.addr %s158, 8
        %s160 = scalar_lea.vmem %s0, %s159
        %s161 = smul.u32 32, %s10
      $region32: #{tpu_custom_call.1} parent=27 // pred_fallthru
        _
    $region28: #{tpu_custom_call.1} parent=5 // pred_fallthru
      _
    %p162 = scmp.le.s32.totalorder 1, %s10
    %p163 = scmp.lt.s32.totalorder %s10, 3
    %p164 = pnand %p162, %p163
    %p165 = pneg %p164
    // Predicated region
    $region33: #{tpu_custom_call.1} parent=5 // pred_check
      _
    $region34: #{tpu_custom_call.1} parent=5 // pred_check_branch
      %167 = sbr.rel (%p164) target = $region36
    $region35: #{tpu_custom_call.1} parent=5 // pred_region
      %s168 = ssub.s32 %s10, 1
      %s169 = smul.u32 32, %s15
      %p170 = scmp.lt.s32.totalorder %s169, 63
      %s171 = scalar_select %p170, %s169, 63
      %s172 = smul.addr %s171, 8
      %s173 = scalar_lea.vmem %s0, %s172
      %p174 = pneg %p36
      %p175 = pneg %p33
      %p176 = pneg %p57
      %p177 = pneg %p54
      %p178 = pneg %p78
      %p179 = pneg %p75
      %p180 = pneg %p99
      %p181 = pneg %p96
      %p182 = pneg %p125
      %p183 = pneg %p122
      %s184 = smul.u32 32, %s15
      %p185 = scmp.lt.s32.totalorder %s184, 63
      %s186 = scalar_select %p185, %s184, 63
      %s187 = smul.addr %s186, 8
      %s188 = scalar_lea.vmem %s4, %s187
      %s189 = smul.u32 32, %s15
      %p190 = scmp.lt.s32.totalorder %s189, 63
      %s191 = scalar_select %p190, %s189, 63
      %s192 = smul.addr %s191, 8
      %s193 = scalar_lea.vmem %s0, %s192
      %s194 = smul.u32 32, %s15
      %s195 = smul.u32 32, %s15
      %p196 = scmp.lt.s32.totalorder %s195, 63
      %s197 = scalar_select %p196, %s195, 63
      %s198 = smul.addr %s197, 8
      %s199 = scalar_lea.vmem %s4, %s198
      %s200 = smul.u32 32, %s15
      %v201 = vld [vmem:[%s193] sm:$0xff]
      %v202 = vld [vmem:[%s193 + $0x8] sm:$0xff]
      %v203 = vld [vmem:[%s193 + $0x10] sm:$0xff]
      %v204 = vld [vmem:[%s193 + $0x18] sm:$0xff]
      %v205 = vld [vmem:[%s193 + $0x20] sm:$0xff]
      %v206 = vld [vmem:[%s193 + $0x28] sm:$0xff]
      %v207 = vld [vmem:[%s193 + $0x30] sm:$0xff]
      %v208 = vld [vmem:[%s193 + $0x38] sm:$0xff]
      %v209 = vld [vmem:[%s193 + $0x40] sm:$0xff]
      %v210 = vld [vmem:[%s193 + $0x48] sm:$0xff]
      %v211 = vld [vmem:[%s193 + $0x50] sm:$0xff]
      %v212 = vld [vmem:[%s193 + $0x58] sm:$0xff]
      %v213 = vld [vmem:[%s193 + $0x60] sm:$0xff]
      %v214 = vld [vmem:[%s193 + $0x68] sm:$0xff]
      %v215 = vld [vmem:[%s193 + $0x70] sm:$0xff]
      %v216 = vld [vmem:[%s193 + $0x78] sm:$0xff]
      %v217 = vld [vmem:[%s193 + $0x80] sm:$0xff]
      %v218 = vld [vmem:[%s193 + $0x88] sm:$0xff]
      %v219 = vld [vmem:[%s193 + $0x90] sm:$0xff]
      %v220 = vld [vmem:[%s193 + $0x98] sm:$0xff]
      %v221 = vld [vmem:[%s193 + $0xa0] sm:$0xff]
      %v222 = vld [vmem:[%s193 + $0xa8] sm:$0xff]
      %v223 = vld [vmem:[%s193 + $0xb0] sm:$0xff]
      %v224 = vld [vmem:[%s193 + $0xb8] sm:$0xff]
      %v225 = vld [vmem:[%s193 + $0xc0] sm:$0xff]
      %v226 = vld [vmem:[%s193 + $0xc8] sm:$0xff]
      %v227 = vld [vmem:[%s193 + $0xd0] sm:$0xff]
      %v228 = vld [vmem:[%s193 + $0xd8] sm:$0xff]
      %v229 = vld [vmem:[%s193 + $0xe0] sm:$0xff]
      %v230 = vld [vmem:[%s193 + $0xe8] sm:$0xff]
      %v231 = vld [vmem:[%s193 + $0xf0] sm:$0xff]
      %v232 = vld [vmem:[%s193 + $0xf8] sm:$0xff]
      %v233 = vld [vmem:[%s1] sm:$0xff]
      %v234 = vld [vmem:[%s1 + $0x8] sm:$0xff]
      %v235 = vld [vmem:[%s1 + $0x10] sm:$0xff]
      %v236 = vld [vmem:[%s1 + $0x18] sm:$0xff]
      %v237 = vld [vmem:[%s1 + $0x20] sm:$0xff]
      %v238 = vld [vmem:[%s1 + $0x28] sm:$0xff]
      %v239 = vld [vmem:[%s1 + $0x30] sm:$0xff]
      %v240 = vld [vmem:[%s1 + $0x38] sm:$0xff]
      %v241 = vld [vmem:[%s1 + $0x40] sm:$0xff]
      %vm242 = vcmask 588800
      %v244 = vsel %vm242, %v201, 0
      %v247 = vsel %vm242, %v202, 0
      %v250 = vsel %vm242, %v203, 0
      %v253 = vsel %vm242, %v204, 0
      %v256 = vsel %vm242, %v205, 0
      %v259 = vsel %vm242, %v206, 0
      %v262 = vsel %vm242, %v207, 0
      %v265 = vsel %vm242, %v208, 0
      %v268 = vsel %vm242, %v209, 0
      %v271 = vsel %vm242, %v210, 0
      %v274 = vsel %vm242, %v211, 0
      %v277 = vsel %vm242, %v212, 0
      %v280 = vsel %vm242, %v213, 0
      %v283 = vsel %vm242, %v214, 0
      %v286 = vsel %vm242, %v215, 0
      %v289 = vsel %vm242, %v216, 0
      %v292 = vsel %vm242, %v217, 0
      %v295 = vsel %vm242, %v218, 0
      %v298 = vsel %vm242, %v219, 0
      %v301 = vsel %vm242, %v220, 0
      %v304 = vsel %vm242, %v221, 0
      %v307 = vsel %vm242, %v222, 0
      %v310 = vsel %vm242, %v223, 0
      %v313 = vsel %vm242, %v224, 0
      %v316 = vsel %vm242, %v225, 0
      %v319 = vsel %vm242, %v226, 0
      %v322 = vsel %vm242, %v227, 0
      %v325 = vsel %vm242, %v228, 0
      %v328 = vsel %vm242, %v229, 0
      %v331 = vsel %vm242, %v230, 0
      %v334 = vsel %vm242, %v231, 0
      %v337 = vsel %vm242, %v232, 0
      %339 = vmatpush.msra.mxu0 0.0
      %340 = vmatpush.msra.mxu0 0.0
      %341 = vmatpush.msra.mxu0 0.0
      %342 = vmatpush.msra.mxu0 0.0
      %343 = vmatpush.msra.mxu0 0.0
      %344 = vmatpush.msra.mxu0 0.0
      %345 = vmatpush.msra.mxu0 0.0
      %346 = vmatpush.msra.mxu0 %v241
      %347 = vmatpush.msra.mxu0 %v240
      %348 = vmatpush.msra.mxu0 %v239
      %349 = vmatpush.msra.mxu0 %v238
      %350 = vmatpush.msra.mxu0 %v237
      %351 = vmatpush.msra.mxu0 %v236
      %352 = vmatpush.msra.mxu0 %v235
      %353 = vmatpush.msra.mxu0 %v234
      %354 = vmatpush.msra.mxu0 %v233
      %355 = vmatmul.f32.gmra.mxu0 %v244
      %v356 = vpop.f32.mrf.mxu0
      %v357 = vadd.f32 0.0, %v356
      %358 = vmatmul.f32.gmra.mxu0 %v247
      %v359 = vpop.f32.mrf.mxu0
      %v360 = vadd.f32 0.0, %v359
      %361 = vmatmul.f32.gmra.mxu0 %v250
      %v362 = vpop.f32.mrf.mxu0
      %v363 = vadd.f32 0.0, %v362
      %364 = vmatmul.f32.gmra.mxu0 %v253
      %v365 = vpop.f32.mrf.mxu0
      %v366 = vadd.f32 0.0, %v365
      %367 = vmatmul.f32.gmra.mxu0 %v256
      %v368 = vpop.f32.mrf.mxu0
      %v369 = vadd.f32 0.0, %v368
      %370 = vmatmul.f32.gmra.mxu0 %v259
      %v371 = vpop.f32.mrf.mxu0
      %v372 = vadd.f32 0.0, %v371
      %373 = vmatmul.f32.gmra.mxu0 %v262
      %v374 = vpop.f32.mrf.mxu0
      %v375 = vadd.f32 0.0, %v374
      %376 = vmatmul.f32.gmra.mxu0 %v265
      %v377 = vpop.f32.mrf.mxu0
      %v378 = vadd.f32 0.0, %v377
      %379 = vmatmul.f32.gmra.mxu0 %v268
      %v380 = vpop.f32.mrf.mxu0
      %v381 = vadd.f32 0.0, %v380
      %382 = vmatmul.f32.gmra.mxu0 %v271
      %v383 = vpop.f32.mrf.mxu0
      %v384 = vadd.f32 0.0, %v383
      %385 = vmatmul.f32.gmra.mxu0 %v274
      %v386 = vpop.f32.mrf.mxu0
      %v387 = vadd.f32 0.0, %v386
      %388 = vmatmul.f32.gmra.mxu0 %v277
      %v389 = vpop.f32.mrf.mxu0
      %v390 = vadd.f32 0.0, %v389
      %391 = vmatmul.f32.gmra.mxu0 %v280
      %v392 = vpop.f32.mrf.mxu0
      %v393 = vadd.f32 0.0, %v392
      %394 = vmatmul.f32.gmra.mxu0 %v283
      %v395 = vpop.f32.mrf.mxu0
      %v396 = vadd.f32 0.0, %v395
      %397 = vmatmul.f32.gmra.mxu0 %v286
      %v398 = vpop.f32.mrf.mxu0
      %v399 = vadd.f32 0.0, %v398
      %400 = vmatmul.f32.gmra.mxu0 %v289
      %v401 = vpop.f32.mrf.mxu0
      %v402 = vadd.f32 0.0, %v401
      %403 = vmatmul.f32.gmra.mxu0 %v292
      %v404 = vpop.f32.mrf.mxu0
      %v405 = vadd.f32 0.0, %v404
      %406 = vmatmul.f32.gmra.mxu0 %v295
      %v407 = vpop.f32.mrf.mxu0
      %v408 = vadd.f32 0.0, %v407
      %409 = vmatmul.f32.gmra.mxu0 %v298
      %v410 = vpop.f32.mrf.mxu0
      %v411 = vadd.f32 0.0, %v410
      %412 = vmatmul.f32.gmra.mxu0 %v301
      %v413 = vpop.f32.mrf.mxu0
      %v414 = vadd.f32 0.0, %v413
      %415 = vmatmul.f32.gmra.mxu0 %v304
      %v416 = vpop.f32.mrf.mxu0
      %v417 = vadd.f32 0.0, %v416
      %418 = vmatmul.f32.gmra.mxu0 %v307
      %v419 = vpop.f32.mrf.mxu0
      %v420 = vadd.f32 0.0, %v419
      %421 = vmatmul.f32.gmra.mxu0 %v310
      %v422 = vpop.f32.mrf.mxu0
      %v423 = vadd.f32 0.0, %v422
      %424 = vmatmul.f32.gmra.mxu0 %v313
      %v425 = vpop.f32.mrf.mxu0
      %v426 = vadd.f32 0.0, %v425
      %427 = vmatmul.f32.gmra.mxu0 %v316
      %v428 = vpop.f32.mrf.mxu0
      %v429 = vadd.f32 0.0, %v428
      %430 = vmatmul.f32.gmra.mxu0 %v319
      %v431 = vpop.f32.mrf.mxu0
      %v432 = vadd.f32 0.0, %v431
      %433 = vmatmul.f32.gmra.mxu0 %v322
      %v434 = vpop.f32.mrf.mxu0
      %v435 = vadd.f32 0.0, %v434
      %436 = vmatmul.f32.gmra.mxu0 %v325
      %v437 = vpop.f32.mrf.mxu0
      %v438 = vadd.f32 0.0, %v437
      %439 = vmatmul.f32.gmra.mxu0 %v328
      %v440 = vpop.f32.mrf.mxu0
      %v441 = vadd.f32 0.0, %v440
      %442 = vmatmul.f32.gmra.mxu0 %v331
      %v443 = vpop.f32.mrf.mxu0
      %v444 = vadd.f32 0.0, %v443
      %445 = vmatmul.f32.gmra.mxu0 %v334
      %v446 = vpop.f32.mrf.mxu0
      %v447 = vadd.f32 0.0, %v446
      %448 = vmatmul.f32.gmra.mxu0 %v337
      %v449 = vpop.f32.mrf.mxu0
      %v450 = vadd.f32 0.0, %v449
      %451 = vdwg.mxu0
      %v452 = vld [vmem:[%s2] sm:$0x1]
      %v454 = vperm.slane %v452, 0
      %v456 = vmul.f32 %v357, %v454
      %v457 = vmul.f32 %v360, %v454
      %v458 = vmul.f32 %v363, %v454
      %v459 = vmul.f32 %v366, %v454
      %v460 = vmul.f32 %v369, %v454
      %v461 = vmul.f32 %v372, %v454
      %v462 = vmul.f32 %v375, %v454
      %v463 = vmul.f32 %v378, %v454
      %v464 = vmul.f32 %v381, %v454
      %v465 = vmul.f32 %v384, %v454
      %v466 = vmul.f32 %v387, %v454
      %v467 = vmul.f32 %v390, %v454
      %v468 = vmul.f32 %v393, %v454
      %v469 = vmul.f32 %v396, %v454
      %v470 = vmul.f32 %v399, %v454
      %v471 = vmul.f32 %v402, %v454
      %v472 = vmul.f32 %v405, %v454
      %v473 = vmul.f32 %v408, %v454
      %v474 = vmul.f32 %v411, %v454
      %v475 = vmul.f32 %v414, %v454
      %v476 = vmul.f32 %v417, %v454
      %v477 = vmul.f32 %v420, %v454
      %v478 = vmul.f32 %v423, %v454
      %v479 = vmul.f32 %v426, %v454
      %v480 = vmul.f32 %v429, %v454
      %v481 = vmul.f32 %v432, %v454
      %v482 = vmul.f32 %v435, %v454
      %v483 = vmul.f32 %v438, %v454
      %v484 = vmul.f32 %v441, %v454
      %v485 = vmul.f32 %v444, %v454
      %v486 = vmul.f32 %v447, %v454
      %v487 = vmul.f32 %v450, %v454
      %v488 = vld [vmem:[%s3] sm:$0x1]
      %v490 = vperm.slane %v488, 0
      %v492 = vadd.f32 %v456, %v490
      %v493 = vadd.f32 %v457, %v490
      %v494 = vadd.f32 %v458, %v490
      %v495 = vadd.f32 %v459, %v490
      %v496 = vadd.f32 %v460, %v490
      %v497 = vadd.f32 %v461, %v490
      %v498 = vadd.f32 %v462, %v490
      %v499 = vadd.f32 %v463, %v490
      %v500 = vadd.f32 %v464, %v490
      %v501 = vadd.f32 %v465, %v490
      %v502 = vadd.f32 %v466, %v490
      %v503 = vadd.f32 %v467, %v490
      %v504 = vadd.f32 %v468, %v490
      %v505 = vadd.f32 %v469, %v490
      %v506 = vadd.f32 %v470, %v490
      %v507 = vadd.f32 %v471, %v490
      %v508 = vadd.f32 %v472, %v490
      %v509 = vadd.f32 %v473, %v490
      %v510 = vadd.f32 %v474, %v490
      %v511 = vadd.f32 %v475, %v490
      %v512 = vadd.f32 %v476, %v490
      %v513 = vadd.f32 %v477, %v490
      %v514 = vadd.f32 %v478, %v490
      %v515 = vadd.f32 %v479, %v490
      %v516 = vadd.f32 %v480, %v490
      %v517 = vadd.f32 %v481, %v490
      %v518 = vadd.f32 %v482, %v490
      %v519 = vadd.f32 %v483, %v490
      %v520 = vadd.f32 %v484, %v490
      %v521 = vadd.f32 %v485, %v490
      %v522 = vadd.f32 %v486, %v490
      %v523 = vadd.f32 %v487, %v490
      %vm524 = vcmask 31744
      %525 = vst.msk [vmem:[%s199] sm:$0xff] %vm524, %v492
      %526 = vst.msk [vmem:[%s199 + $0x8] sm:$0xff] %vm524, %v493
      %527 = vst.msk [vmem:[%s199 + $0x10] sm:$0xff] %vm524, %v494
      %528 = vst.msk [vmem:[%s199 + $0x18] sm:$0xff] %vm524, %v495
      %529 = vst.msk [vmem:[%s199 + $0x20] sm:$0xff] %vm524, %v496
      %530 = vst.msk [vmem:[%s199 + $0x28] sm:$0xff] %vm524, %v497
      %531 = vst.msk [vmem:[%s199 + $0x30] sm:$0xff] %vm524, %v498
      %532 = vst.msk [vmem:[%s199 + $0x38] sm:$0xff] %vm524, %v499
      %533 = vst.msk [vmem:[%s199 + $0x40] sm:$0xff] %vm524, %v500
      %534 = vst.msk [vmem:[%s199 + $0x48] sm:$0xff] %vm524, %v501
      %535 = vst.msk [vmem:[%s199 + $0x50] sm:$0xff] %vm524, %v502
      %536 = vst.msk [vmem:[%s199 + $0x58] sm:$0xff] %vm524, %v503
      %537 = vst.msk [vmem:[%s199 + $0x60] sm:$0xff] %vm524, %v504
      %538 = vst.msk [vmem:[%s199 + $0x68] sm:$0xff] %vm524, %v505
      %539 = vst.msk [vmem:[%s199 + $0x70] sm:$0xff] %vm524, %v506
      %540 = vst.msk [vmem:[%s199 + $0x78] sm:$0xff] %vm524, %v507
      %541 = vst.msk [vmem:[%s199 + $0x80] sm:$0xff] %vm524, %v508
      %542 = vst.msk [vmem:[%s199 + $0x88] sm:$0xff] %vm524, %v509
      %543 = vst.msk [vmem:[%s199 + $0x90] sm:$0xff] %vm524, %v510
      %544 = vst.msk [vmem:[%s199 + $0x98] sm:$0xff] %vm524, %v511
      %545 = vst.msk [vmem:[%s199 + $0xa0] sm:$0xff] %vm524, %v512
      %546 = vst.msk [vmem:[%s199 + $0xa8] sm:$0xff] %vm524, %v513
      %547 = vst.msk [vmem:[%s199 + $0xb0] sm:$0xff] %vm524, %v514
      %548 = vst.msk [vmem:[%s199 + $0xb8] sm:$0xff] %vm524, %v515
      %549 = vst.msk [vmem:[%s199 + $0xc0] sm:$0xff] %vm524, %v516
      %550 = vst.msk [vmem:[%s199 + $0xc8] sm:$0xff] %vm524, %v517
      %551 = vst.msk [vmem:[%s199 + $0xd0] sm:$0xff] %vm524, %v518
      %552 = vst.msk [vmem:[%s199 + $0xd8] sm:$0xff] %vm524, %v519
      %553 = vst.msk [vmem:[%s199 + $0xe0] sm:$0xff] %vm524, %v520
      %554 = vst.msk [vmem:[%s199 + $0xe8] sm:$0xff] %vm524, %v521
      %555 = vst.msk [vmem:[%s199 + $0xf0] sm:$0xff] %vm524, %v522
      %556 = vst.msk [vmem:[%s199 + $0xf8] sm:$0xff] %vm524, %v523
      %s557 = smul.u32 32, %s15
      %p558 = scmp.lt.s32.totalorder %s557, 63
      %s559 = scalar_select %p558, %s557, 63
      %s560 = smul.addr %s559, 8
      %s561 = scalar_lea.vmem %s4, %s560
      // Predicated region
      $region37: #{tpu_custom_call.1} parent=35 // pred_check
        %p562 = pneg %p122
      $region38: #{tpu_custom_call.1} parent=35 // pred_check_branch
        %564 = sbr.rel (%p562) target = $region40
      $region39: #{tpu_custom_call.1} parent=35 // pred_region
        %s565 = smul.u32 32, %s15
      $region40: #{tpu_custom_call.1} parent=35 // pred_fallthru
        _
    $region36: #{tpu_custom_call.1} parent=5 // pred_fallthru
      _
    %p566 = scmp.le.s32.totalorder 2, %s10
    // Predicated region
    $region41: #{tpu_custom_call.1} parent=5 // pred_check
      %p567 = pneg %p566
    $region42: #{tpu_custom_call.1} parent=5 // pred_check_branch
      %569 = sbr.rel (%p567) target = $region44
    $region43: #{tpu_custom_call.1} parent=5 // pred_region
      %s570 = ssub.s32 %s10, 2
      // Predicated region
      $region45: #{tpu_custom_call.1} parent=43 // pred_check
        %p571 = pneg %p128
      $region46: #{tpu_custom_call.1} parent=43 // pred_check_branch
        %573 = sbr.rel (%p571) target = $region48
      $region47: #{tpu_custom_call.1} parent=43 // pred_region
        %s574 = smul.u32 32, %s16
        %p575 = scmp.lt.s32.totalorder %s574, 63
        %s576 = scalar_select %p575, %s574, 63
        %s577 = smul.addr %s576, 8
        %s578 = scalar_lea.vmem %s4, %s577
      $region48: #{tpu_custom_call.1} parent=43 // pred_fallthru
        _
    $region44: #{tpu_custom_call.1} parent=5 // pred_fallthru
      _
  $region6: #{tpu_custom_call.1} parent=0 // loop_footer
    %s14 = sadd.s32 1, %s10
  $region7: #{tpu_custom_call.1} parent=0 // loop_footer_branch
    %9 = sbr.rel target = $region3
  $region8: #{tpu_custom_call.1} parent=0 // loop_exit
    _

</llo_original>
